<compile_context>
chip_gen: v7x
topology: tpu7x:2x2x1
jax: 0.10.0
libtpu: 0.0.40
codegen_flags: <defaults>
</compile_context>

<pallas_src>
import math

import jax
import jax.numpy as jnp
from jax.experimental import pallas as pl
from jax.experimental.pallas import tpu as pltpu

_STATS_LANES = 128  # lane-dense online-softmax stats width


def _default_vmem_limit_bytes():
    cap = 64 * 1024 * 1024
    try:
        info = pltpu.get_tpu_info()
        cap = int(getattr(info, "vmem_capacity_bytes", cap))
    except Exception:
        pass
    # leave ~25% headroom for compiler scratch / double-buffering slack
    return max(32 * 1024 * 1024, (cap * 3) // 4)


_VMEM_LIMIT_BYTES = _default_vmem_limit_bytes()


# ----------------------------- in-kernel math ------------------------------

def _layernorm(x, gamma, beta, eps=1e-5):
    # matches nn.LayerNorm: biased variance, eps=1e-5, elementwise affine
    mu = jnp.mean(x, axis=-1, keepdims=True)
    var = jnp.mean((x - mu) ** 2, axis=-1, keepdims=True)
    return (x - mu) * jax.lax.rsqrt(var + eps) * gamma + beta


def _gelu(x):
    # tanh-approximation GELU (as in the reference GPT implementation)
    c = 0.7978845608028654  # sqrt(2/pi)
    return 0.5 * x * (1.0 + jnp.tanh(c * (x + 0.044715 * x * x * x)))


def _bcast_cols(x, n):
    """x: (rows, 128) lane-replicated stats; return (rows, n), same value/row."""
    w = x.shape[-1]
    if n == w:
        return x
    if n < w:
        return x[:, :n]
    if n % w == 0:
        return jnp.concatenate([x] * (n // w), axis=-1)
    return jnp.broadcast_to(x[:, :1], (x.shape[0], n))


def _ce(flops, bytes_accessed, transcendentals=0):
    return pl.CostEstimate(flops=int(flops),
                           transcendentals=int(transcendentals),
                           bytes_accessed=int(bytes_accessed))


def _pick_tile(dim, pref, align):
    """Largest tile <= pref that divides dim and is a multiple of align,
    else the full dim (full-dim blocks are always legal)."""
    t = min(pref, dim)
    t -= t % align
    while t >= align:
        if dim % t == 0:
            return t
        t -= align
    return dim


def _const_spec(shape, grid_rank):
    """BlockSpec for a weight that stays resident across the whole grid."""
    zeros = (0,) * len(shape)
    if grid_rank == 1:
        return pl.BlockSpec(shape, lambda i: zeros)
    if grid_rank == 2:
        return pl.BlockSpec(shape, lambda i, j: zeros)
    return pl.BlockSpec(shape, lambda i, j, k: zeros)


def _cparams(sem):
    return pltpu.CompilerParams(dimension_semantics=sem,
                                vmem_limit_bytes=_VMEM_LIMIT_BYTES)


# ------------------------------ Pallas kernels ------------------------------

def ln_qkv_kernel(x_ref, g_ref, b_ref, wqkv_ref, q_ref, k_ref, v_ref):
    """Pre-LN + fused full-width QKV projection for one row-tile of tokens."""
    x = x_ref[...]                                           # (tm, E) f32
    E = x.shape[-1]
    h = _layernorm(x, g_ref[...], b_ref[...])
    qkv = jnp.dot(h.astype(jnp.bfloat16), wqkv_ref[...],
                  preferred_element_type=jnp.float32)        # (tm, 3E) f32
    q_ref[...] = qkv[:, :E].astype(q_ref.dtype)
    k_ref[...] = qkv[:, E:2 * E].astype(k_ref.dtype)
    v_ref[...] = qkv[:, 2 * E:].astype(v_ref.dtype)


def flash_attn_kernel(q_ref, k_ref, v_ref, o_ref, m_sc, l_sc, acc_sc):
    """Causal flash attention with heads on the grid.

    grid = (B*H, num_q_tiles, num_kv_tiles); kv axis last / 'arbitrary'.
    Blocks: (1, tq, Dh).  Requires tq == tk (enforced by the wrapper).
    Stats scratch is lane-dense (tq, 128); context scratch (tq, Dh).
    """
    qi = pl.program_id(1)
    ki = pl.program_id(2)
    nk = pl.num_programs(2)
    tq = q_ref.shape[1]
    tk = k_ref.shape[1]
    dh = q_ref.shape[2]
    scale = 1.0 / math.sqrt(dh)

    @pl.when(ki == 0)
    def _init():
        m_sc[...] = jnp.full(m_sc.shape, -jnp.inf, jnp.float32)
        l_sc[...] = jnp.zeros(l_sc.shape, jnp.float32)
        acc_sc[...] = jnp.zeros(acc_sc.shape, jnp.float32)

    # Causally-dead KV tiles (ki > qi): compute skipped here, DMA skipped via
    # the clamped index_map in run_flash_attention.
    @pl.when(ki <= qi)
    def _compute():
        q = q_ref[0]                                         # (tq, Dh) bf16
        k = k_ref[0]                                         # (tk, Dh) bf16
        v = v_ref[0]                                         # (tk, Dh) bf16
        s = jax.lax.dot_general(
            q, k, (((1,), (1,)), ((), ())),
            preferred_element_type=jnp.float32) * scale      # (tq, tk) f32

        def _update(s_in):
            m_prev = m_sc[...]                               # (tq, 128)
            m_curr = jnp.max(s_in, axis=-1, keepdims=True)   # (tq, 1)
            m_next = jnp.maximum(m_prev, m_curr)             # (tq, 128)
            alpha = jnp.exp(m_prev - m_next)                 # (tq, 128)
            p = jnp.exp(s_in - _bcast_cols(m_next, tk))      # (tq, tk)
            l_sc[...] = alpha * l_sc[...] + jnp.sum(p, axis=-1, keepdims=True)
            acc_sc[...] = (_bcast_cols(alpha, dh) * acc_sc[...]
                           + jnp.dot(p.astype(jnp.bfloat16), v,
                                     preferred_element_type=jnp.float32))
            m_sc[...] = m_next

        @pl.when(ki == qi)                                   # diagonal: mask
        def _diag():
            row = jax.lax.broadcasted_iota(jnp.int32, (tq, tk), 0)
            col = jax.lax.broadcasted_iota(jnp.int32, (tq, tk), 1)
            _update(jnp.where(col > row, jnp.float32(-1e30), s))

        @pl.when(ki < qi)                                    # interior: no mask
        def _interior():
            _update(s)

    @pl.when(ki == nk - 1)
    def _finalize():
        inv_l = pl.reciprocal(l_sc[...], approx=True)        # EUP, ~free
        o_ref[0] = (acc_sc[...] * _bcast_cols(inv_l, dh)).astype(o_ref.dtype)


def attn_out_ffn_kernel(x_ref, ctx_ref, wo_ref, bo_ref,
                        ln2_g_ref, ln2_b_ref,
                        w1_ref, b1_ref, w2_ref, b2_ref, o_ref):
    """attn output proj + residual, then pre-LN FFN + residual (one row tile)."""
    # TODO(synk): for v7x at E >= ~1280, tile the FFN over Hff (or single-buffer
    # the resident weight specs) to stay under the 64 MiB physical VMEM.
    x = x_ref[...]                                           # (tm, E) f32
    attn_out = jnp.dot(ctx_ref[...], wo_ref[...],
                       preferred_element_type=jnp.float32) + bo_ref[...]
    x = x + attn_out                                         # residual 1 (f32)

    h = _layernorm(x, ln2_g_ref[...], ln2_b_ref[...])
    ff = jnp.dot(h.astype(jnp.bfloat16), w1_ref[...],
                 preferred_element_type=jnp.float32) + b1_ref[...]
    ff = _gelu(ff)
    ff = jnp.dot(ff.astype(jnp.bfloat16), w2_ref[...],
                 preferred_element_type=jnp.float32) + b2_ref[...]
    o_ref[...] = (x + ff).astype(o_ref.dtype)                # residual 2


def final_ln_kernel(x_ref, g_ref, b_ref, o_ref):
    """Final LayerNorm applied once per row tile; emits bf16 for the LM head."""
    o_ref[...] = _layernorm(x_ref[...], g_ref[...], b_ref[...]).astype(o_ref.dtype)


def lm_head_kernel(xn_ref, wout_ref, o_ref):
    """(rows, vocab)-tiled LM head matmul; LayerNorm already pre-applied."""
    o_ref[...] = jnp.dot(xn_ref[...], wout_ref[...],
                         preferred_element_type=jnp.float32).astype(o_ref.dtype)


# ------------------------------ host wrappers -------------------------------

def run_ln_qkv(x2d, blk, tm):
    rows, E = x2d.shape
    grid = (rows // tm,)
    act_in = pl.BlockSpec((tm, E), lambda i: (i, 0))
    act_out = pl.BlockSpec((tm, E), lambda i: (i, 0))
    flops = 2 * rows * E * 3 * E
    bytes_acc = rows * E * 4 + E * 3 * E * 2 + 3 * rows * E * 2 + 2 * E * 4
    return pl.pallas_call(
        ln_qkv_kernel,
        out_shape=tuple(jax.ShapeDtypeStruct((rows, E), jnp.bfloat16)
                        for _ in range(3)),
        grid=grid,
        in_specs=[act_in,
                  _const_spec((1, E), 1), _const_spec((1, E), 1),
                  _const_spec((E, 3 * E), 1)],
        out_specs=(act_out, act_out, act_out),
        compiler_params=_cparams(("parallel",)),
        cost_estimate=_ce(flops, bytes_acc, transcendentals=rows),
    )(x2d, blk['ln1_g'].reshape(1, E), blk['ln1_b'].reshape(1, E), blk['wqkv'])


def run_flash_attention(q, k, v, tq):
    """q/k/v: (B*H, S, Dh) bf16.  tq == tk."""
    BH, S, Dh = q.shape
    assert S % tq == 0
    nq = S // tq
    grid = (BH, nq, nq)
    q_spec = pl.BlockSpec((1, tq, Dh), lambda b, i, j: (b, i, 0))
    # Clamp the KV block index so fully-future tiles map to the previously
    # fetched block -> Pallas dedups the DMA (no wasted HBM reads).
    kv_spec = pl.BlockSpec((1, tq, Dh), lambda b, i, j: (b, jnp.minimum(j, i), 0))
    o_spec = pl.BlockSpec((1, tq, Dh), lambda b, i, j: (b, i, 0))
    flops = 2 * BH * S * S * Dh            # ~causal half of 4*BH*S*S*Dh
    transc = BH * S * S // 2
    bytes_acc = 4 * BH * S * Dh * 2
    return pl.pallas_call(
        flash_attn_kernel,
        out_shape=jax.ShapeDtypeStruct((BH, S, Dh), jnp.bfloat16),
        grid=grid,
        in_specs=[q_spec, kv_spec, kv_spec],
        out_specs=o_spec,
        scratch_shapes=[
            pltpu.VMEM((tq, _STATS_LANES), jnp.float32),   # running max
            pltpu.VMEM((tq, _STATS_LANES), jnp.float32),   # running denom
            pltpu.VMEM((tq, Dh), jnp.float32),             # running context
        ],
        compiler_params=_cparams(("parallel", "parallel", "arbitrary")),
        cost_estimate=_ce(flops, bytes_acc, transc),
    )(q, k, v)


def run_attn_out_ffn(x2d, ctx2d, blk, tm):
    rows, E = x2d.shape
    Hff = blk['w1'].shape[1]
    grid = (rows // tm,)
    x_spec = pl.BlockSpec((tm, E), lambda i: (i, 0))
    flops = 2 * rows * E * E + 4 * rows * E * Hff
    bytes_acc = (2 * rows * E * 4 + rows * E * 2
                 + (E * E + 2 * E * Hff) * 2 + (3 * E + Hff) * 4)
    return pl.pallas_call(
        attn_out_ffn_kernel,
        out_shape=jax.ShapeDtypeStruct((rows, E), jnp.float32),
        grid=grid,
        in_specs=[x_spec, x_spec,
                  _const_spec((E, E), 1), _const_spec((1, E), 1),
                  _const_spec((1, E), 1), _const_spec((1, E), 1),
                  _const_spec((E, Hff), 1), _const_spec((1, Hff), 1),
                  _const_spec((Hff, E), 1), _const_spec((1, E), 1)],
        out_specs=x_spec,
        compiler_params=_cparams(("parallel",)),
        cost_estimate=_ce(flops, bytes_acc, transcendentals=rows * (Hff + 1)),
    )(x2d, ctx2d, blk['wo'], blk['bo'].reshape(1, E),
      blk['ln2_g'].reshape(1, E), blk['ln2_b'].reshape(1, E),
      blk['w1'], blk['b1'].reshape(1, Hff),
      blk['w2'], blk['b2'].reshape(1, E))


def run_final_ln(x2d, params, tm):
    rows, E = x2d.shape
    grid = (rows // tm,)
    act = pl.BlockSpec((tm, E), lambda i: (i, 0))
    return pl.pallas_call(
        final_ln_kernel,
        out_shape=jax.ShapeDtypeStruct((rows, E), jnp.bfloat16),
        grid=grid,
        in_specs=[act, _const_spec((1, E), 1), _const_spec((1, E), 1)],
        out_specs=act,
        compiler_params=_cparams(("parallel",)),
        cost_estimate=_ce(10 * rows * E, rows * E * 6 + 2 * E * 4,
                          transcendentals=rows),
    )(x2d, params['fn_g'].reshape(1, E), params['fn_b'].reshape(1, E))


def run_lm_head(xn, w_out, tm, tn):
    """xn: (rows, E) bf16 (already layer-normed).  Vocab axis is the OUTER grid
    dim and rows the INNER one, so each (E, tn) w_out tile is streamed exactly
    once from HBM."""
    rows, E = xn.shape
    V = w_out.shape[1]
    grid = (V // tn, rows // tm)
    x_spec = pl.BlockSpec((tm, E), lambda j, i: (i, 0))
    w_spec = pl.BlockSpec((E, tn), lambda j, i: (0, j))
    o_spec = pl.BlockSpec((tm, tn), lambda j, i: (i, j))
    flops = 2 * rows * E * V
    bytes_acc = rows * E * 2 + E * V * 2 + rows * V * 4
    return pl.pallas_call(
        lm_head_kernel,
        out_shape=jax.ShapeDtypeStruct((rows, V), jnp.float32),
        grid=grid,
        in_specs=[x_spec, w_spec],
        out_specs=o_spec,
        compiler_params=_cparams(("parallel", "arbitrary")),
        cost_estimate=_ce(flops, bytes_acc),
    )(xn, w_out)


# ------------------------------ head split glue ------------------------------

def _split_heads(x2d, B, S, H, Dh):
    return x2d.reshape(B, S, H, Dh).transpose(0, 2, 1, 3).reshape(B * H, S, Dh)


def _merge_heads(ctx, B, S, H, Dh):
    return ctx.reshape(B, H, S, Dh).transpose(0, 2, 1, 3).reshape(B * S, H * Dh)


# --------------------------------- forward ----------------------------------

def my_gpt_forward(in_idx, params, cfg):
    # TODO(synk): optional padding attn_mask (forward's attn_mask arg) is not
    # plumbed through; only the causal mask is implemented (attn_mask=None).
    B, S = in_idx.shape
    E = cfg['emb_dim']
    H = cfg['n_heads']
    V = cfg['vocab_size']
    Dh = E // H
    rows = B * S

    tok = jnp.take(params['tok_emb'], in_idx, axis=0)        # gather (glue)
    pos = params['pos_emb'][:S][None, :, :]                  # (1, S, E)
    x = (tok + pos).astype(jnp.float32).reshape(rows, E)     # drop_emb: identity

    tm = _pick_tile(rows, 512, 16)     # token-row tile (bf16-packing aligned)
    tq = _pick_tile(S, 256, 16)        # query == key tile

    for blk in params['blocks']:
        q, k, v = run_ln_qkv(x, blk, tm)
        qh = _split_heads(q, B, S, H, Dh)
        kh = _split_heads(k, B, S, H, Dh)
        vh = _split_heads(v, B, S, H, Dh)
        ctx = run_flash_attention(qh, kh, vh, tq)
        ctx2d = _merge_heads(ctx, B, S, H, Dh)
        x = run_attn_out_ffn(x, ctx2d, blk, tm)

    xn = run_final_ln(x, params, tm)                         # LN applied once
    tn = _pick_tile(V, 512, 128)       # lane-dense vocab tile for real vocabs
    logits = run_lm_head(xn, params['w_out'], tm, tn)
    return logits.reshape(B, S, V)


# -------------------------- deterministic param init ------------------------

def init_params(cfg, key):
    E, V, L = cfg['emb_dim'], cfg['vocab_size'], cfg['max_length']
    Hff = 4 * E
    keys = iter(jax.random.split(key, 8 + 8 * cfg['n_layers']))

    def nrm(shape, dtype=jnp.float32, scale=0.02):
        return (scale * jax.random.normal(next(keys), shape)).astype(dtype)

    # Matmul weights stored in bf16 (MXU fast path); LN/bias params in f32.
    # TODO(synk): cfg['qkv_bias']=True is not plumbed (reference config uses False).
    # TODO(synk): v7x-only fp8 weight storage for w_out / FFN not implemented.
    params = {
        'tok_emb': nrm((V, E)),
        'pos_emb': nrm((L, E)),
        'fn_g': jnp.ones((E,), jnp.float32),
        'fn_b': jnp.zeros((E,), jnp.float32),
        'w_out': nrm((E, V), jnp.bfloat16),
        'blocks': [],
    }
    for _ in range(cfg['n_layers']):
        params['blocks'].append({
            'ln1_g': jnp.ones((E,), jnp.float32),
            'ln1_b': jnp.zeros((E,), jnp.float32),
            'wqkv': nrm((E, 3 * E), jnp.bfloat16),    # fused Q|K|V projection
            'wo': nrm((E, E), jnp.bfloat16),
            'bo': jnp.zeros((E,), jnp.float32),
            'ln2_g': jnp.ones((E,), jnp.float32),
            'ln2_b': jnp.zeros((E,), jnp.float32),
            'w1': nrm((E, Hff), jnp.bfloat16),
            'b1': jnp.zeros((Hff,), jnp.float32),
            'w2': nrm((Hff, E), jnp.bfloat16),
            'b2': jnp.zeros((E,), jnp.float32),
        })
    return params


# ----------------------------------- main ------------------------------------

if __name__ == "__main__":
    cfg = {
        'vocab_size': 64,
        'emb_dim': 32,
        'n_heads': 4,
        'n_layers': 2,
        'max_length': 8,
        'drop_rate': 0.1,   # identity at inference
        'qkv_bias': False,
    }
    key = jax.random.PRNGKey(0)
    pkey, ikey = jax.random.split(key)
    params = init_params(cfg, pkey)

    B, S = 2, 8
    in_idx = jax.random.randint(ikey, (B, S), 0, cfg['vocab_size'], dtype=jnp.int32)

    logits = my_gpt_forward(in_idx, params, cfg)
    logits = jax.block_until_ready(logits)
    assert logits.shape == (B, S, cfg['vocab_size'])
    assert bool(jnp.all(jnp.isfinite(logits)))
    print("KERNEL_OK")
</pallas_src>

<mosaic_0001>
module attributes {stable_mosaic.version = 11 : i64} {
  func.func @ln_qkv_kernel(%arg0: i32, %arg1: memref<16x32xf32, #tpu.memory_space<vmem>>, %arg2: memref<1x32xf32, #tpu.memory_space<vmem>>, %arg3: memref<1x32xf32, #tpu.memory_space<vmem>>, %arg4: memref<32x96xbf16, #tpu.memory_space<vmem>>, %arg5: memref<16x32xbf16, #tpu.memory_space<vmem>>, %arg6: memref<16x32xbf16, #tpu.memory_space<vmem>>, %arg7: memref<16x32xbf16, #tpu.memory_space<vmem>>) attributes {dimension_semantics = [#tpu.dimension_semantics<parallel>], iteration_bounds = array<i64: 1>, scalar_prefetch = 0 : i64, scratch_operands = 0 : i64, tpu.core_type = #tpu.core_type<tc>, window_params = [{transform_indices = @transform_0, window_bounds = array<i64: 16, 32>}, {pipeline_mode = #tpu.pipeline_mode<synchronous>, transform_indices = @transform_1, window_bounds = array<i64: 1, 32>}, {pipeline_mode = #tpu.pipeline_mode<synchronous>, transform_indices = @transform_2, window_bounds = array<i64: 1, 32>}, {pipeline_mode = #tpu.pipeline_mode<synchronous>, transform_indices = @transform_3, window_bounds = array<i64: 32, 96>}, {transform_indices = @transform_4, window_bounds = array<i64: 16, 32>}, {transform_indices = @transform_5, window_bounds = array<i64: 16, 32>}, {transform_indices = @transform_6, window_bounds = array<i64: 16, 32>}]} {
    %c0 = arith.constant 0 : index
    %c0_0 = arith.constant 0 : index
    %0 = vector.load %arg1[%c0, %c0_0] : memref<16x32xf32, #tpu.memory_space<vmem>>, vector<16x32xf32>
    %c0_1 = arith.constant 0 : index
    %c0_2 = arith.constant 0 : index
    %1 = vector.load %arg2[%c0_1, %c0_2] : memref<1x32xf32, #tpu.memory_space<vmem>>, vector<1x32xf32>
    %c0_3 = arith.constant 0 : index
    %c0_4 = arith.constant 0 : index
    %2 = vector.load %arg3[%c0_3, %c0_4] : memref<1x32xf32, #tpu.memory_space<vmem>>, vector<1x32xf32>
    %cst = arith.constant dense<0.000000e+00> : vector<16xf32>
    %3 = vector.multi_reduction <add>, %0, %cst [1] : vector<16x32xf32> to vector<16xf32>
    %4 = vector.shape_cast %3 : vector<16xf32> to vector<16x1xf32>
    %cst_5 = arith.constant 3.200000e+01 : f32
    %5 = vector.broadcast %cst_5 : f32 to vector<16x1xf32>
    %6 = arith.divf %4, %5 : vector<16x1xf32>
    %7 = vector.broadcast %6 : vector<16x1xf32> to vector<16x32xf32>
    %8 = arith.subf %0, %7 : vector<16x32xf32>
    %9 = arith.mulf %8, %8 : vector<16x32xf32>
    %cst_6 = arith.constant dense<0.000000e+00> : vector<16xf32>
    %10 = vector.multi_reduction <add>, %9, %cst_6 [1] : vector<16x32xf32> to vector<16xf32>
    %11 = vector.shape_cast %10 : vector<16xf32> to vector<16x1xf32>
    %cst_7 = arith.constant 3.200000e+01 : f32
    %12 = vector.broadcast %cst_7 : f32 to vector<16x1xf32>
    %13 = arith.divf %11, %12 : vector<16x1xf32>
    %14 = vector.broadcast %6 : vector<16x1xf32> to vector<16x32xf32>
    %15 = arith.subf %0, %14 : vector<16x32xf32>
    %cst_8 = arith.constant 9.99999974E-6 : f32
    %16 = vector.broadcast %cst_8 : f32 to vector<16x1xf32>
    %17 = arith.addf %13, %16 : vector<16x1xf32>
    %18 = math.rsqrt %17 : vector<16x1xf32>
    %19 = vector.broadcast %18 : vector<16x1xf32> to vector<16x32xf32>
    %20 = arith.mulf %15, %19 : vector<16x32xf32>
    %21 = vector.broadcast %1 : vector<1x32xf32> to vector<16x32xf32>
    %22 = arith.mulf %20, %21 : vector<16x32xf32>
    %23 = vector.broadcast %2 : vector<1x32xf32> to vector<16x32xf32>
    %24 = arith.addf %22, %23 : vector<16x32xf32>
    %25 = arith.truncf %24 : vector<16x32xf32> to vector<16x32xbf16>
    %c0_9 = arith.constant 0 : index
    %c0_10 = arith.constant 0 : index
    %26 = vector.load %arg4[%c0_9, %c0_10] : memref<32x96xbf16, #tpu.memory_space<vmem>>, vector<32x96xbf16>
    %cst_11 = arith.constant dense<0.000000e+00> : vector<16x96xf32>
    %27 = tpu.matmul %25, %26, %cst_11 {dimension_numbers = #tpu.dot_dimension_numbers<[1], [0], [0], [1], [0, 0, 1, 1], [], []>} : vector<16x32xbf16>, vector<32x96xbf16>, vector<16x96xf32> -> vector<16x96xf32>
    %28 = vector.extract_strided_slice %27 {offsets = [0, 0], sizes = [16, 32], strides = [1, 1]} : vector<16x96xf32> to vector<16x32xf32>
    %29 = arith.truncf %28 : vector<16x32xf32> to vector<16x32xbf16>
    %c0_12 = arith.constant 0 : index
    %c0_13 = arith.constant 0 : index
    %30 = vector.load %arg5[%c0_12, %c0_13] : memref<16x32xbf16, #tpu.memory_space<vmem>>, vector<16x32xbf16>
    tpu.vector_store %arg5[%c0_12, %c0_13], %29 {strides = array<i32>} : memref<16x32xbf16, #tpu.memory_space<vmem>>, vector<16x32xbf16>,
    %31 = vector.extract_strided_slice %27 {offsets = [0, 32], sizes = [16, 32], strides = [1, 1]} : vector<16x96xf32> to vector<16x32xf32>
    %32 = arith.truncf %31 : vector<16x32xf32> to vector<16x32xbf16>
    %c0_14 = arith.constant 0 : index
    %c0_15 = arith.constant 0 : index
    %33 = vector.load %arg6[%c0_14, %c0_15] : memref<16x32xbf16, #tpu.memory_space<vmem>>, vector<16x32xbf16>
    tpu.vector_store %arg6[%c0_14, %c0_15], %32 {strides = array<i32>} : memref<16x32xbf16, #tpu.memory_space<vmem>>, vector<16x32xbf16>,
    %34 = vector.extract_strided_slice %27 {offsets = [0, 64], sizes = [16, 32], strides = [1, 1]} : vector<16x96xf32> to vector<16x32xf32>
    %35 = arith.truncf %34 : vector<16x32xf32> to vector<16x32xbf16>
    %c0_16 = arith.constant 0 : index
    %c0_17 = arith.constant 0 : index
    %36 = vector.load %arg7[%c0_16, %c0_17] : memref<16x32xbf16, #tpu.memory_space<vmem>>, vector<16x32xbf16>
    tpu.vector_store %arg7[%c0_16, %c0_17], %35 {strides = array<i32>} : memref<16x32xbf16, #tpu.memory_space<vmem>>, vector<16x32xbf16>,
    return
  }
  func.func @transform_0(%arg0: i32) -> (i32, i32) {
    %c0_i32 = arith.constant 0 : i32
    %c0_i32_0 = arith.constant 0 : i32
    return %arg0, %c0_i32 : i32, i32
  }
  func.func @transform_1(%arg0: i32) -> (i32, i32) {
    %c0_i32 = arith.constant 0 : i32
    %c0_i32_0 = arith.constant 0 : i32
    %c0_i32_1 = arith.constant 0 : i32
    return %c0_i32, %c0_i32_0 : i32, i32
  }
  func.func @transform_2(%arg0: i32) -> (i32, i32) {
    %c0_i32 = arith.constant 0 : i32
    %c0_i32_0 = arith.constant 0 : i32
    %c0_i32_1 = arith.constant 0 : i32
    return %c0_i32, %c0_i32_0 : i32, i32
  }
  func.func @transform_3(%arg0: i32) -> (i32, i32) {
    %c0_i32 = arith.constant 0 : i32
    %c0_i32_0 = arith.constant 0 : i32
    %c0_i32_1 = arith.constant 0 : i32
    return %c0_i32, %c0_i32_0 : i32, i32
  }
  func.func @transform_4(%arg0: i32) -> (i32, i32) {
    %c0_i32 = arith.constant 0 : i32
    %c0_i32_0 = arith.constant 0 : i32
    return %arg0, %c0_i32 : i32, i32
  }
  func.func @transform_5(%arg0: i32) -> (i32, i32) {
    %c0_i32 = arith.constant 0 : i32
    %c0_i32_0 = arith.constant 0 : i32
    return %arg0, %c0_i32 : i32, i32
  }
  func.func @transform_6(%arg0: i32) -> (i32, i32) {
    %c0_i32 = arith.constant 0 : i32
    %c0_i32_0 = arith.constant 0 : i32
    return %arg0, %c0_i32 : i32, i32
  }
}

</mosaic_0001>

<llo_original>
// kernel: tpu_custom_call.1
$region0: #{tpu_custom_call.1}
  #allocation0 [shape = 'u32[]', space=smem, size = 0x4, offset = 0x4, fixed_abs, tag = 'smem constant byte address 0x4 - core index']
  #allocation1 [shape = 'u32[144,128]{1,0:T(1,128)}', space=vmem, size = 0x12000, scoped, tag = 'internal scratch']
  %s0 = inlined_call_operand.hbm [shape: f32[16,32], index: 0, kind: input, shape index: {}]
  %s1 = inlined_call_operand.vmem [shape: f32[1,32], index: 1, kind: input, shape index: {}]
  %s2 = inlined_call_operand.vmem [shape: f32[1,32], index: 2, kind: input, shape index: {}]
  %s3 = inlined_call_operand.hbm [shape: bf16[32,96], index: 3, kind: input, shape index: {}]
  %s4 = inlined_call_operand.hbm [shape: bf16[16,32], index: 4, kind: output, shape index: {0}]
  %s5 = inlined_call_operand.hbm [shape: bf16[16,32], index: 5, kind: output, shape index: {1}]
  %s6 = inlined_call_operand.hbm [shape: bf16[16,32], index: 6, kind: output, shape index: {2}]
  %7 = xla_tuple %s4, %s5, %s6
  %s8 = sld [smem:[#allocation0]]
  $region50: #{tpu_custom_call.1} parent=0
    _
  %s10 = ssub.s32 1, %s8
  %s11 = scalar_select 0, %s10, %s8
  $region1: #{tpu_custom_call.1} parent=0
    #allocation2 [shape = 'u8[8192]{0}', space=vmem, size = 0x2000, scoped, tag = 'input window, operand 0, single buffered']
    #allocation3 [shape = 's32[1]{0}', space=sflag, size = 0x4, scoped, tag = 'scoped memory for tpu_custom_call.1']
    #allocation4 [shape = 's32[1]{0}', space=sflag, size = 0x4, scoped, tag = 'scoped memory for tpu_custom_call.1']
    #allocation5 [shape = 'u8[8192]{0}', space=vmem, size = 0x2000, scoped, tag = 'input window, operand 3, single buffered']
    #allocation6 [shape = 's32[1]{0}', space=sflag, size = 0x4, scoped, tag = 'scoped memory for tpu_custom_call.1']
    #allocation7 [shape = 'u8[4096]{0}', space=vmem, size = 0x1000, scoped, tag = 'output window, operand 0, single buffered']
    #allocation8 [shape = 'u8[4096]{0}', space=vmem, size = 0x1000, scoped, tag = 'output window, operand 1, single buffered']
    #allocation9 [shape = 's32[1]{0}', space=sflag, size = 0x4, scoped, tag = 'scoped memory for tpu_custom_call.1']
    #allocation10 [shape = 'u8[4096]{0}', space=vmem, size = 0x1000, scoped, tag = 'output window, operand 2, single buffered']
    %12 = vsyncpa [#allocation3], 0
    %13 = vsyncpa [#allocation6], 0
    %14 = vsyncpa [#allocation4], 0
    %15 = vsyncpa [#allocation9], 0
    // Predicated region
    $region2: #{tpu_custom_call.1} parent=1 // pred_check
      _
    $region3: #{tpu_custom_call.1} parent=1 // pred_check_branch
      %17 = sbr.rel (0) target = $region5
    $region4: #{tpu_custom_call.1} parent=1 // pred_region
      %s19 = ssub.s32 256, 256
      %20 = vsyncadd [#allocation3], %s19
      %s21 = sshll.u32 [#allocation2], 4
      %s22 = int_to_ptr.vmem [resolvable:$true] %s21
      %27 = dma.hbm_to_vmem [thread:$0]  %s0, 256, %s22, [#allocation3], 128, 128, 8
    $region5: #{tpu_custom_call.1} parent=1 // pred_fallthru
      _
    // Predicated region
    $region6: #{tpu_custom_call.1} parent=1 // pred_check
      _
    $region7: #{tpu_custom_call.1} parent=1 // pred_check_branch
      %29 = sbr.rel (0) target = $region9
    $region8: #{tpu_custom_call.1} parent=1 // pred_region
      _
    $region9: #{tpu_custom_call.1} parent=1 // pred_fallthru
      _
    // Predicated region
    $region10: #{tpu_custom_call.1} parent=1 // pred_check
      _
    $region11: #{tpu_custom_call.1} parent=1 // pred_check_branch
      %31 = sbr.rel (0) target = $region13
    $region12: #{tpu_custom_call.1} parent=1 // pred_region
      _
    $region13: #{tpu_custom_call.1} parent=1 // pred_fallthru
      _
    // Predicated region
    $region14: #{tpu_custom_call.1} parent=1 // pred_check
      _
    $region15: #{tpu_custom_call.1} parent=1 // pred_check_branch
      %33 = sbr.rel (0) target = $region17
    $region16: #{tpu_custom_call.1} parent=1 // pred_region
      %s35 = ssub.s32 256, 256
      %36 = vsyncadd [#allocation6], %s35
      %s37 = sshll.u32 [#allocation5], 4
      %s38 = int_to_ptr.vmem [resolvable:$true] %s37
      %43 = dma.hbm_to_vmem [thread:$0]  %s3, 256, %s38, [#allocation6], 64, 64, 4
    $region17: #{tpu_custom_call.1} parent=1 // pred_fallthru
      _
    // Predicated region
    $region18: #{tpu_custom_call.1} parent=1 // pred_check
      _
    $region19: #{tpu_custom_call.1} parent=1 // pred_check_branch
      %45 = sbr.rel (0) target = $region21
    $region20: #{tpu_custom_call.1} parent=1 // pred_region
      %46 = dma.done [#allocation3], 256
    $region21: #{tpu_custom_call.1} parent=1 // pred_fallthru
      _
    // Predicated region
    $region22: #{tpu_custom_call.1} parent=1 // pred_check
      _
    $region23: #{tpu_custom_call.1} parent=1 // pred_check_branch
      %48 = sbr.rel (0) target = $region25
    $region24: #{tpu_custom_call.1} parent=1 // pred_region
      %49 = dma.done [#allocation6], 256
    $region25: #{tpu_custom_call.1} parent=1 // pred_fallthru
      _
    %v51 = vld [vmem:[#allocation2] sm:$0xff]
    %v52 = vld [vmem:[#allocation2 + $0x8] sm:$0xff]
    %v53 = vld [vmem:[%s1] sm:$0x1]
    %v54 = vld [vmem:[%s2] sm:$0x1]
    %vm55 = vcmask 261120
    %v56 = vsel %vm55, %v51, 0.0
    %57 = vadd.xlane.f32.xlu0 %v56
    %v58 = vpop.xlane.xlu0 %57
    %v59 = vsel %vm55, %v52, 0.0
    %60 = vadd.xlane.f32.xlu0 %v59
    %v61 = vpop.xlane.xlu0 %60
    %v62 = vrcp.pop 32.0
    %v63 = vmul.f32 %v58, %v62
    %v64 = vmul.f32 %v61, %v62
    %v65 = vsub.f32 %v51, %v63
    %v66 = vsub.f32 %v52, %v64
    %v67 = vmul.f32 %v65, %v65
    %v68 = vmul.f32 %v66, %v66
    %v69 = vsel %vm55, %v67, 0.0
    %70 = vadd.xlane.f32.xlu0 %v69
    %v71 = vpop.xlane.xlu0 %70
    %v72 = vsel %vm55, %v68, 0.0
    %73 = vadd.xlane.f32.xlu0 %v72
    %v74 = vpop.xlane.xlu0 %73
    %v75 = vmul.f32 %v71, %v62
    %v76 = vmul.f32 %v74, %v62
    %v77 = vadd.f32 %v75, 1e-05
    %v78 = vadd.f32 %v76, 1e-05
    %v79 = vrsqrt.pop %v77
    %v80 = vrsqrt.pop %v78
    %v81 = vmul.f32 %v65, %v79
    %v82 = vmul.f32 %v66, %v80
    %v84 = vlaneseq
    %v85 = vshrl.u32 %v84, 7
    %v86 = vsub.s32 0, %v85
    %v87 = vrot.slane %v53, %v86
    %v89 = vmul.f32 %v81, %v87
    %v90 = vmul.f32 %v82, %v87
    %v92 = vlaneseq
    %v93 = vshrl.u32 %v92, 7
    %v94 = vsub.s32 0, %v93
    %v95 = vrot.slane %v54, %v94
    %v97 = vadd.f32 %v89, %v95
    %v98 = vadd.f32 %v90, %v95
    %v99 = vpack.c.bf16 %v98, %v97
    %v100 = vld [vmem:[#allocation5] sm:$0xf]
    %v101 = vld [vmem:[#allocation5 + $0x4] sm:$0xf]
    %v102 = vld [vmem:[#allocation5 + $0x8] sm:$0xf]
    %v103 = vld [vmem:[#allocation5 + $0xc] sm:$0xf]
    %v108 = vunpack.c.l.b16 %v100
    %v109 = vunpack.c.l.b16 %v101
    %v110 = vunpack.c.l.b16 %v102
    %v111 = vunpack.c.l.b16 %v103
    %v112 = vpack.c.b16 %v109, %v108
    %v113 = vpack.c.b16 %v111, %v110
    %v117 = vsel %vm55, %v99, 0
    %119 = vmatprep.subr.bf16.mxu0 0
    %120 = vmatpush1.bf16.msra.mxu0 %v112
    %121 = vmatprep.subr.bf16.mxu0 0
    %122 = vmatpush1.bf16.msra.mxu0 %v113
    %123 = vmatprep.subr.bf16.mxu0 0
    %124 = vmatpush1.bf16.msra.mxu0 0
    %125 = vmatprep.subr.bf16.mxu0 0
    %126 = vmatpush1.bf16.msra.mxu0 0
    %127 = vmatprep.subr.bf16.mxu0 0
    %128 = vmatpush1.bf16.msra.mxu0 0
    %129 = vmatprep.subr.bf16.mxu0 0
    %130 = vmatpush1.bf16.msra.mxu0 0
    %131 = vmatprep.subr.bf16.mxu0 0
    %132 = vmatpush1.bf16.msra.mxu0 0
    %133 = vmatprep.subr.bf16.mxu0 0
    %134 = vmatpush1.bf16.msra.mxu0 0
    %135 = vmatprep.subr.bf16.mxu0 0
    %136 = vmatpush1.bf16.msra.mxu0 0
    %137 = vmatprep.subr.bf16.mxu0 0
    %138 = vmatpush1.bf16.msra.mxu0 0
    %139 = vmatprep.subr.bf16.mxu0 0
    %140 = vmatpush1.bf16.msra.mxu0 0
    %141 = vmatprep.subr.bf16.mxu0 0
    %142 = vmatpush1.bf16.msra.mxu0 0
    %143 = vmatprep.subr.bf16.mxu0 0
    %144 = vmatpush1.bf16.msra.mxu0 0
    %145 = vmatprep.subr.bf16.mxu0 0
    %146 = vmatpush1.bf16.msra.mxu0 0
    %147 = vmatprep.subr.bf16.mxu0 0
    %148 = vmatpush1.bf16.msra.mxu0 0
    %149 = vmatprep.subr.bf16.mxu0 0
    %150 = vmatpush1.bf16.msra.mxu0 0
    %151 = vmatprep.mubr.bf16.mxu0 0
    %152 = vmatmul.mubr.bf16.gmra.mrb[0].mxu0 %v117
    %v153 = vpop.f32.mrb[0].mxu0
    %v154 = vadd.f32 0.0, %v153
    %v155 = vpop.f32.mrb[0].mxu0
    %v156 = vpop.f32.mrb[0].mxu0
    %v157 = vadd.f32 0.0, %v156
    %v158 = vpop.f32.mrb[0].mxu0
    %159 = vdwg.mxu0
    %v160 = vpack.c.bf16 %v157, %v154
    %v162 = vunpack.c.l.b16 %v160
    %v163 = vunpack.c.h.b16 %v160
    %v164 = vpack.c.b16 %v162, %v162
    %v165 = vpack.c.b16 %v163, %v163
    %vm168 = vcmask 257024
    %169 = vst.msk [vmem:[#allocation7] sm:$0xf] %vm168, %v164
    %170 = vst.msk [vmem:[#allocation7 + $0x4] sm:$0xf] %vm168, %v165
    %171 = vrot.lane.b32.xlu0 %v164, 96
    %v172 = vpop.permute.xlu0 %171
    %173 = vrot.lane.b32.xlu0 %v165, 96
    %v174 = vpop.permute.xlu0 %173
    %177 = vst.msk [vmem:[#allocation8] sm:$0xf] %vm168, %v172
    %178 = vst.msk [vmem:[#allocation8 + $0x4] sm:$0xf] %vm168, %v174
    %179 = vrot.lane.b32.xlu0 %v164, 64
    %v180 = vpop.permute.xlu0 %179
    %181 = vrot.lane.b32.xlu0 %v165, 64
    %v182 = vpop.permute.xlu0 %181
    %185 = vst.msk [vmem:[#allocation10] sm:$0xf] %vm168, %v180
    %186 = vst.msk [vmem:[#allocation10 + $0x4] sm:$0xf] %vm168, %v182
    // Predicated region
    $region26: #{tpu_custom_call.1} parent=1 // pred_check
      _
    $region27: #{tpu_custom_call.1} parent=1 // pred_check_branch
      %188 = sbr.rel (0) target = $region29
    $region28: #{tpu_custom_call.1} parent=1 // pred_region
      %s190 = ssub.s32 128, 128
      %191 = vsyncadd [#allocation4], %s190
      %s192 = sshll.u32 [#allocation7], 4
      %s193 = int_to_ptr.vmem [resolvable:$true] %s192
      %198 = dma.vmem_to_hbm [thread:$0]  %s193, 128, %s4, [#allocation4], 64, 64, 4
    $region29: #{tpu_custom_call.1} parent=1 // pred_fallthru
      _
    // Predicated region
    $region30: #{tpu_custom_call.1} parent=1 // pred_check
      _
    $region31: #{tpu_custom_call.1} parent=1 // pred_check_branch
      %200 = sbr.rel (0) target = $region33
    $region32: #{tpu_custom_call.1} parent=1 // pred_region
      %s202 = ssub.s32 128, 128
      %203 = vsyncadd [#allocation9], %s202
      %s204 = sshll.u32 [#allocation8], 4
      %s205 = int_to_ptr.vmem [resolvable:$true] %s204
      %210 = dma.vmem_to_hbm [thread:$0]  %s205, 128, %s5, [#allocation9], 64, 64, 4
    $region33: #{tpu_custom_call.1} parent=1 // pred_fallthru
      _
    // Predicated region
    $region34: #{tpu_custom_call.1} parent=1 // pred_check
      _
    $region35: #{tpu_custom_call.1} parent=1 // pred_check_branch
      %212 = sbr.rel (0) target = $region37
    $region36: #{tpu_custom_call.1} parent=1 // pred_region
      %s214 = ssub.s32 128, 128
      %215 = vsyncadd [#allocation9], %s214
      %s216 = sshll.u32 [#allocation10], 4
      %s217 = int_to_ptr.vmem [resolvable:$true] %s216
      %222 = dma.vmem_to_hbm [thread:$0]  %s217, 128, %s6, [#allocation9], 64, 64, 4
    $region37: #{tpu_custom_call.1} parent=1 // pred_fallthru
      _
    // Predicated region
    $region38: #{tpu_custom_call.1} parent=1 // pred_check
      _
    $region39: #{tpu_custom_call.1} parent=1 // pred_check_branch
      %224 = sbr.rel (0) target = $region41
    $region40: #{tpu_custom_call.1} parent=1 // pred_region
      %225 = dma.done [#allocation4], 128
    $region41: #{tpu_custom_call.1} parent=1 // pred_fallthru
      _
    // Predicated region
    $region42: #{tpu_custom_call.1} parent=1 // pred_check
      _
    $region43: #{tpu_custom_call.1} parent=1 // pred_check_branch
      %227 = sbr.rel (0) target = $region45
    $region44: #{tpu_custom_call.1} parent=1 // pred_region
      %228 = dma.done [#allocation9], 128
    $region45: #{tpu_custom_call.1} parent=1 // pred_fallthru
      _
    // Predicated region
    $region46: #{tpu_custom_call.1} parent=1 // pred_check
      _
    $region47: #{tpu_custom_call.1} parent=1 // pred_check_branch
      %230 = sbr.rel (0) target = $region49
    $region48: #{tpu_custom_call.1} parent=1 // pred_region
      %231 = dma.done [#allocation9], 128
    $region49: #{tpu_custom_call.1} parent=1 // pred_fallthru
      _
    %232 = vsyncpa [#allocation3], 1
    %233 = vsyncpa [#allocation6], 1
    %234 = vsyncpa [#allocation4], 1
    %235 = vsyncpa [#allocation9], 1

</llo_original>
